<compile_context>
chip_gen: v7x
topology: tpu7x:2x2x1
jax: 0.10.0
libtpu: 0.0.40
codegen_flags: <defaults>
</compile_context>

<pallas_src>
import functools

import jax
import jax.numpy as jnp
import numpy as np
from jax import lax
from jax.experimental import pallas as pl
from jax.experimental.pallas import tpu as pltpu

# ---- Model dimensions (ActionDecoder, layers=(32,), high*width=16) ----
LATENT_DIM = 32
ACTION_DIM = 5
ACTION_EMBED = 10
STATE_DIM = 16          # == args.high * args.width (e.g. high=4, width=4)
STATE_EMBED = 10
REWARD_DIM = 1
REWARD_EMBED = 5
HIDDEN = 32             # layers = (32,)

ENC_IN = STATE_DIM + ACTION_DIM + REWARD_DIM + 1        # 23 (last lane = bias 1.0)
ENC_OUT = STATE_EMBED + ACTION_EMBED + REWARD_EMBED     # 25 (= [hs | ha | hr])
REWARD_LANE = STATE_DIM + ACTION_DIM                    # 21
BIAS_LANE = REWARD_LANE + 1                             # 22
FC1_IN = LATENT_DIM + ENC_OUT                           # 57 = cat(latent, hs, ha, hr)
PACK_W = FC1_IN + 3 + ACTION_DIM                        # 65 packed lanes / logical row


def _cdiv(a, b):
    return -(-a // b)


def _round_up(x, m):
    return ((x + m - 1) // m) * m


def _device_kind():
    try:
        return jax.devices()[0].device_kind.lower()
    except Exception:
        return ""


def _default_group():
    """Row-packing factor G: the fused fc1 contraction depth is G*57; keep it
    within one MXU pass (128-deep on v2..v5e, 256-deep on v6e/v7x)."""
    kind = _device_kind()
    if "v6" in kind or "v7" in kind:
        return 4          # 4*57 = 228 <= 256
    return 2              # 2*57 = 114 <= 128


def _multi_tensorcore_chip():
    """Chips where a ("parallel",) grid axis can shard across 2 TensorCores."""
    kind = _device_kind()
    return any(t in kind for t in ("v4", "v5p", "v7"))


def action_decoder_kernel(packed_ref, wenc_ref, w1_ref, b1_ref, wo_ref, bo_ref,
                          out_ref, *, group):
    """One grid step: `tile` packed rows; each packed row = `group` logical rows.

    Packed lane layout (per packed row, G = group):
      [0      : 57G)  fc1-input latent slots: lanes 57g..57g+31 = latent_g,
                      lanes 57g+32..57g+56 = 0 (encoder slots, filled below)
      [57G    : 58G)  state index (carried as f32), one lane per group
      [58G    : 59G)  action index (carried as f32)
      [59G    : 60G)  reward
      [60G    : 65G)  uniform(0,1) Gumbel noise, 5 lanes per group
    """
    G = group
    tn = packed_ref.shape[0]
    f32 = jnp.float32
    base = G * FC1_IN

    # --- fused state/action/reward encoder input, built in-register --------
    # Per group g lanes: [23g..23g+15]=one_hot(state), [+16..+20]=one_hot(action),
    # [+21]=reward, [+22]=1.0 (bias lane).
    iota = lax.broadcasted_iota(jnp.int32, (tn, G * ENC_IN), 1)
    enc_in = jnp.zeros((tn, G * ENC_IN), f32)
    for g in range(G):
        off = g * ENC_IN
        sidx = packed_ref[:, base + g:base + g + 1].astype(jnp.int32)
        aidx = packed_ref[:, base + G + g:base + G + g + 1].astype(jnp.int32)
        rew = packed_ref[:, base + 2 * G + g:base + 2 * G + g + 1]
        onehot = jnp.logical_or(iota == sidx + off,
                                iota == aidx + (off + STATE_DIM)).astype(f32)
        enc_in = enc_in + onehot
        enc_in = jnp.where(iota == off + REWARD_LANE, rew, enc_in)
        enc_in = jnp.where(iota == off + BIAS_LANE, 1.0, enc_in)

    # relu of all three encoders (weights AND biases packed block-diagonally).
    # wenc's latent columns are zero, so the relu'd result already sits in the
    # fc1-input lane layout (lanes 57g+32..57g+56), with exact zeros elsewhere.
    enc_wide = jnp.maximum(
        jnp.dot(enc_in, wenc_ref[...], preferred_element_type=f32), 0.0)

    # fc_layers[0](cat(latent, hs, ha, hr)): latent (no relu) was pre-placed in
    # the packed input with zeros in the encoder slots, so a single add + one
    # fused (57G, 32G) matmul covers the whole layer.
    x1 = packed_ref[:, 0:base] + enc_wide
    h = jnp.maximum(
        jnp.dot(x1, w1_ref[...], preferred_element_type=f32) + b1_ref[...], 0.0)

    # fc_out
    logits = jnp.dot(h, wo_ref[...], preferred_element_type=f32) + bo_ref[...]

    # gumbel_softmax(logits, tau=1, hard=False), done per 5-lane group.
    # TODO(synk): Gumbel noise could be generated in-kernel with
    # pltpu.prng_seed/prng_random_bits to drop the unif lanes; kept host-fed
    # for bit-parity with the reference.
    unif = packed_ref[:, base + 3 * G:base + 3 * G + G * ACTION_DIM]
    y = logits - jnp.log(-jnp.log(unif))
    outs = []
    for g in range(G):
        z = y[:, g * ACTION_DIM:(g + 1) * ACTION_DIM]
        z = z - jnp.max(z, axis=-1, keepdims=True)
        e = jnp.exp(z)
        outs.append(e * pl.reciprocal(jnp.sum(e, axis=-1, keepdims=True),
                                      approx=False))
    out_ref[...] = outs[0] if G == 1 else jnp.concatenate(outs, axis=-1)


def init_params(key):
    """Deterministic synthetic weights in the PyTorch layout (W as (in,out))."""
    ks = jax.random.split(key, 5)

    def lin(k, din, dout):
        kw, kb = jax.random.split(k)
        w = jax.random.normal(kw, (din, dout), jnp.float32) * 0.2
        b = jax.random.normal(kb, (1, dout), jnp.float32) * 0.1
        return w, b

    ws, bs = lin(ks[0], STATE_DIM, STATE_EMBED)
    wa, ba = lin(ks[1], ACTION_DIM, ACTION_EMBED)
    wr, br = lin(ks[2], REWARD_DIM, REWARD_EMBED)
    w1, b1 = lin(ks[3], FC1_IN, HIDDEN)
    wo, bo = lin(ks[4], HIDDEN, ACTION_DIM)
    return [ws, bs, wa, ba, wr, br, w1, b1, wo, bo]


def _block_diag(w, n):
    din, dout = w.shape
    out = jnp.zeros((n * din, n * dout), w.dtype)
    for g in range(n):
        out = out.at[g * din:(g + 1) * din, g * dout:(g + 1) * dout].set(w)
    return out


def pack_params(raw, *, group=2):
    """Pack the 13 PyTorch-layout tensors into 5 fused, G-block-diagonal arrays."""
    ws, bs, wa, ba, wr, br, w1, b1, wo, bo = raw
    G = group

    # Encoders fused block-diagonally AND widened to the 57-lane fc1-input
    # layout: columns 0..31 (latent slots) stay zero; biases are folded into
    # the constant-1.0 bias lane (row 22).
    c0 = LATENT_DIM
    wenc1 = jnp.zeros((ENC_IN, FC1_IN), jnp.float32)
    wenc1 = wenc1.at[0:STATE_DIM, c0:c0 + STATE_EMBED].set(ws)
    wenc1 = wenc1.at[STATE_DIM:STATE_DIM + ACTION_DIM,
                     c0 + STATE_EMBED:c0 + STATE_EMBED + ACTION_EMBED].set(wa)
    wenc1 = wenc1.at[REWARD_LANE,
                     c0 + STATE_EMBED + ACTION_EMBED:FC1_IN].set(wr[0])
    wenc1 = wenc1.at[BIAS_LANE, c0:c0 + STATE_EMBED].set(bs[0])
    wenc1 = wenc1.at[BIAS_LANE,
                     c0 + STATE_EMBED:c0 + STATE_EMBED + ACTION_EMBED].set(ba[0])
    wenc1 = wenc1.at[BIAS_LANE,
                     c0 + STATE_EMBED + ACTION_EMBED:FC1_IN].set(br[0])

    wenc = _block_diag(wenc1, G)        # (23G, 57G)
    w1p = _block_diag(w1, G)            # (57G, 32G)
    b1p = jnp.tile(b1, (1, G))          # (1, 32G)
    wop = _block_diag(wo, G)            # (32G, 5G)
    bop = jnp.tile(bo, (1, G))          # (1, 5G)
    return [wenc, w1p, b1p, wop, bop]


def action_decoder_forward(kernel_params, latent, state_idx, action_idx, reward,
                           unif, *, group=2, row_tile=4096):
    """latent: (T,B,32) f32; state_idx/action_idx: (T,B,1) int; reward: (T,B,1)
    f32; unif: (T,B,5) uniform(0,1) noise for the Gumbel sample.
    `kernel_params` must come from pack_params(..., group=group)."""
    T, B, _ = latent.shape
    N = T * B
    G = int(group)

    # --- packed-row tiling --------------------------------------------------
    Ng = _cdiv(N, G)                                   # packed rows needed
    tile = min(max(1, row_tile // G), _round_up(Ng, 8))
    tile = max(8, (tile // 8) * 8)
    if _multi_tensorcore_chip():
        # Keep >= 2 grid steps (when the problem allows) so ("parallel",) can
        # shard the row axis across both TensorCores; single-TC chips skip this.
        tile = min(tile, max(8, _round_up(_cdiv(Ng, 2), 8)))
    Ng_pad = _round_up(Ng, tile)
    n_rows = Ng_pad * G
    pad = n_rows - N

    # --- consolidate the five per-row streams into ONE packed f32 slab ------
    latent2 = latent.reshape(N, LATENT_DIM).astype(jnp.float32)
    sidx2 = state_idx.reshape(N).astype(jnp.float32)
    aidx2 = action_idx.reshape(N).astype(jnp.float32)
    reward2 = reward.reshape(N).astype(jnp.float32)
    unif2 = jnp.clip(unif.reshape(N, ACTION_DIM).astype(jnp.float32),
                     1e-7, 1.0 - 1e-7)                 # guard -log(-log(u))

    if pad:
        latent2 = jnp.pad(latent2, ((0, pad), (0, 0)))
        sidx2 = jnp.pad(sidx2, ((0, pad),))
        aidx2 = jnp.pad(aidx2, ((0, pad),))
        reward2 = jnp.pad(reward2, ((0, pad),))
        unif2 = jnp.pad(unif2, ((0, pad), (0, 0)), constant_values=0.5)

    lat_slots = jnp.concatenate(
        [latent2.reshape(Ng_pad, G, LATENT_DIM),
         jnp.zeros((Ng_pad, G, ENC_OUT), jnp.float32)],
        axis=-1).reshape(Ng_pad, G * FC1_IN)
    packed = jnp.concatenate(
        [lat_slots,
         sidx2.reshape(Ng_pad, G),
         aidx2.reshape(Ng_pad, G),
         reward2.reshape(Ng_pad, G),
         unif2.reshape(Ng_pad, G * ACTION_DIM)], axis=-1)   # (Ng_pad, 65G)
    pack_w = G * PACK_W

    wenc, w1p, b1p, wop, bop = kernel_params
    mxu_flops = 2 * Ng_pad * sum(int(w.shape[0]) * int(w.shape[1])
                                 for w in (wenc, w1p, wop))
    param_bytes = 4 * sum(int(np.prod(p.shape)) for p in kernel_params)
    cost = pl.CostEstimate(
        flops=mxu_flops,
        transcendentals=n_rows * (3 * ACTION_DIM + 1),
        bytes_accessed=4 * Ng_pad * (pack_w + G * ACTION_DIM) + param_bytes)

    out = pl.pallas_call(
        functools.partial(action_decoder_kernel, group=G),
        out_shape=jax.ShapeDtypeStruct((Ng_pad, G * ACTION_DIM), jnp.float32),
        grid=(Ng_pad // tile,),
        in_specs=[pl.BlockSpec((tile, pack_w), lambda i: (i, 0))]
                 + [pl.BlockSpec(p.shape, lambda i: (0, 0))
                    for p in kernel_params],
        out_specs=pl.BlockSpec((tile, G * ACTION_DIM), lambda i: (i, 0)),
        compiler_params=pltpu.CompilerParams(
            dimension_semantics=("parallel",),
            vmem_limit_bytes=48 * 1024 * 1024),
        cost_estimate=cost,
    )(packed, *kernel_params)

    # (Ng_pad, 5G) -> (rows, 5) is a free contiguous reshape.
    return out.reshape(n_rows, ACTION_DIM)[:N].reshape(T, B, ACTION_DIM)


def ref_forward(raw_params, latent, state_idx, action_idx, reward, unif):
    """Pure-JAX reference reproducing the PyTorch forward (unpacked weights)."""
    ws, bs, wa, ba, wr, br, w1, b1, wo, bo = raw_params
    a_oh = jax.nn.one_hot(action_idx[..., 0], ACTION_DIM, dtype=jnp.float32)
    s_oh = jax.nn.one_hot(state_idx[..., 0], STATE_DIM, dtype=jnp.float32)
    ha = jax.nn.relu(a_oh @ wa + ba)
    hs = jax.nn.relu(s_oh @ ws + bs)
    hr = jax.nn.relu(reward @ wr + br)
    h = jnp.concatenate([latent, hs, ha, hr], axis=-1)
    h = jax.nn.relu(h @ w1 + b1)
    logits = h @ wo + bo
    g = -jnp.log(-jnp.log(unif))
    return jax.nn.softmax(logits + g, axis=-1)


if __name__ == "__main__":
    key = jax.random.PRNGKey(0)
    k_param, k_lat, k_s, k_a, k_r, k_u = jax.random.split(key, 6)

    T, B = 7, 3   # N = 21 rows: exercises group padding, row padding, small grids
    raw = init_params(k_param)

    latent = jax.random.normal(k_lat, (T, B, LATENT_DIM), jnp.float32)
    state_idx = jax.random.randint(k_s, (T, B, 1), 0, STATE_DIM, dtype=jnp.int32)
    action_idx = jax.random.randint(k_a, (T, B, 1), 0, ACTION_DIM, dtype=jnp.int32)
    reward = jax.random.normal(k_r, (T, B, REWARD_DIM), jnp.float32)
    # TODO(synk): PyTorch's gumbel_softmax RNG stream can't be reproduced;
    # deterministic uniform noise is sampled here and fed to the kernel instead.
    unif = jax.random.uniform(k_u, (T, B, ACTION_DIM), jnp.float32,
                              minval=1e-6, maxval=1.0 - 1e-6)

    ref = ref_forward(raw, latent, state_idx, action_idx, reward, unif)

    # Test G=2 (safe on every MXU depth) and the chip-tuned default (G=4 on
    # v6e/v7x) if it differs.
    for g in sorted({2, _default_group()}):
        packed_params = pack_params(raw, group=g)
        out = action_decoder_forward(packed_params, latent, state_idx,
                                     action_idx, reward, unif, group=g)
        out = jax.block_until_ready(out)
        assert out.shape == (T, B, ACTION_DIM)
        np.testing.assert_allclose(np.asarray(out), np.asarray(ref),
                                   rtol=1e-5, atol=1e-5)
        # rows of a softmax must sum to 1
        np.testing.assert_allclose(np.asarray(out).sum(-1), 1.0,
                                   rtol=1e-5, atol=1e-5)

    print("KERNEL_OK")
</pallas_src>

<mosaic_0001>
module attributes {stable_mosaic.version = 11 : i64} {
  func.func @action_decoder_kernel(%arg0: i32, %arg1: memref<16x130xf32, #tpu.memory_space<vmem>>, %arg2: memref<46x114xf32, #tpu.memory_space<vmem>>, %arg3: memref<114x64xf32, #tpu.memory_space<vmem>>, %arg4: memref<1x64xf32, #tpu.memory_space<vmem>>, %arg5: memref<64x10xf32, #tpu.memory_space<vmem>>, %arg6: memref<1x10xf32, #tpu.memory_space<vmem>>, %arg7: memref<16x10xf32, #tpu.memory_space<vmem>>) attributes {dimension_semantics = [#tpu.dimension_semantics<parallel>], iteration_bounds = array<i64: 1>, scalar_prefetch = 0 : i64, scratch_operands = 0 : i64, tpu.core_type = #tpu.core_type<tc>, window_params = [{transform_indices = @transform_0, window_bounds = array<i64: 16, 130>}, {pipeline_mode = #tpu.pipeline_mode<synchronous>, transform_indices = @transform_1, window_bounds = array<i64: 46, 114>}, {pipeline_mode = #tpu.pipeline_mode<synchronous>, transform_indices = @transform_2, window_bounds = array<i64: 114, 64>}, {pipeline_mode = #tpu.pipeline_mode<synchronous>, transform_indices = @transform_3, window_bounds = array<i64: 1, 64>}, {pipeline_mode = #tpu.pipeline_mode<synchronous>, transform_indices = @transform_4, window_bounds = array<i64: 64, 10>}, {pipeline_mode = #tpu.pipeline_mode<synchronous>, transform_indices = @transform_5, window_bounds = array<i64: 1, 10>}, {transform_indices = @transform_6, window_bounds = array<i64: 16, 10>}]} {
    %0 = tpu.iota {dimensions = array<i32: 1>} : vector<16x46xi32>
    %cst = arith.constant 0.000000e+00 : f32
    %1 = vector.broadcast %cst : f32 to vector<16x46xf32>
    %c0 = arith.constant 0 : index
    %c114 = arith.constant 114 : index
    %2 = vector.load %arg1[%c0, %c114] : memref<16x130xf32, #tpu.memory_space<vmem>>, vector<16x1xf32>
    %3 = arith.fptosi %2 : vector<16x1xf32> to vector<16x1xi32>
    %c0_0 = arith.constant 0 : index
    %c116 = arith.constant 116 : index
    %4 = vector.load %arg1[%c0_0, %c116] : memref<16x130xf32, #tpu.memory_space<vmem>>, vector<16x1xf32>
    %5 = arith.fptosi %4 : vector<16x1xf32> to vector<16x1xi32>
    %c0_1 = arith.constant 0 : index
    %c118 = arith.constant 118 : index
    %6 = vector.load %arg1[%c0_1, %c118] : memref<16x130xf32, #tpu.memory_space<vmem>>, vector<16x1xf32>
    %c0_i32 = arith.constant 0 : i32
    %7 = vector.broadcast %c0_i32 : i32 to vector<16x1xi32>
    %8 = arith.addi %3, %7 : vector<16x1xi32>
    %9 = vector.broadcast %8 : vector<16x1xi32> to vector<16x46xi32>
    %10 = arith.cmpi eq, %0, %9 : vector<16x46xi32>
    %c16_i32 = arith.constant 16 : i32
    %11 = vector.broadcast %c16_i32 : i32 to vector<16x1xi32>
    %12 = arith.addi %5, %11 : vector<16x1xi32>
    %13 = vector.broadcast %12 : vector<16x1xi32> to vector<16x46xi32>
    %14 = arith.cmpi eq, %0, %13 : vector<16x46xi32>
    %15 = arith.ori %10, %14 : vector<16x46xi1>
    %16 = arith.extui %15 : vector<16x46xi1> to vector<16x46xi32>
    %17 = arith.sitofp %16 : vector<16x46xi32> to vector<16x46xf32>
    %18 = arith.addf %1, %17 : vector<16x46xf32>
    %c21_i32 = arith.constant 21 : i32
    %19 = vector.broadcast %c21_i32 : i32 to vector<16x46xi32>
    %20 = arith.cmpi eq, %0, %19 : vector<16x46xi32>
    %21 = vector.shape_cast %6 : vector<16x1xf32> to vector<16x1xf32>
    %22 = vector.broadcast %21 : vector<16x1xf32> to vector<16x46xf32>
    %23 = arith.select %20, %22, %18 : vector<16x46xi1>, vector<16x46xf32>
    %c22_i32 = arith.constant 22 : i32
    %24 = vector.broadcast %c22_i32 : i32 to vector<16x46xi32>
    %25 = arith.cmpi eq, %0, %24 : vector<16x46xi32>
    %cst_2 = arith.constant 1.000000e+00 : f32
    %26 = vector.broadcast %cst_2 : f32 to vector<16x46xf32>
    %27 = arith.select %25, %26, %23 : vector<16x46xi1>, vector<16x46xf32>
    %c0_3 = arith.constant 0 : index
    %c115 = arith.constant 115 : index
    %28 = vector.load %arg1[%c0_3, %c115] : memref<16x130xf32, #tpu.memory_space<vmem>>, vector<16x1xf32>
    %29 = arith.fptosi %28 : vector<16x1xf32> to vector<16x1xi32>
    %c0_4 = arith.constant 0 : index
    %c117 = arith.constant 117 : index
    %30 = vector.load %arg1[%c0_4, %c117] : memref<16x130xf32, #tpu.memory_space<vmem>>, vector<16x1xf32>
    %31 = arith.fptosi %30 : vector<16x1xf32> to vector<16x1xi32>
    %c0_5 = arith.constant 0 : index
    %c119 = arith.constant 119 : index
    %32 = vector.load %arg1[%c0_5, %c119] : memref<16x130xf32, #tpu.memory_space<vmem>>, vector<16x1xf32>
    %c23_i32 = arith.constant 23 : i32
    %33 = vector.broadcast %c23_i32 : i32 to vector<16x1xi32>
    %34 = arith.addi %29, %33 : vector<16x1xi32>
    %35 = vector.broadcast %34 : vector<16x1xi32> to vector<16x46xi32>
    %36 = arith.cmpi eq, %0, %35 : vector<16x46xi32>
    %c39_i32 = arith.constant 39 : i32
    %37 = vector.broadcast %c39_i32 : i32 to vector<16x1xi32>
    %38 = arith.addi %31, %37 : vector<16x1xi32>
    %39 = vector.broadcast %38 : vector<16x1xi32> to vector<16x46xi32>
    %40 = arith.cmpi eq, %0, %39 : vector<16x46xi32>
    %41 = arith.ori %36, %40 : vector<16x46xi1>
    %42 = arith.extui %41 : vector<16x46xi1> to vector<16x46xi32>
    %43 = arith.sitofp %42 : vector<16x46xi32> to vector<16x46xf32>
    %44 = arith.addf %27, %43 : vector<16x46xf32>
    %c44_i32 = arith.constant 44 : i32
    %45 = vector.broadcast %c44_i32 : i32 to vector<16x46xi32>
    %46 = arith.cmpi eq, %0, %45 : vector<16x46xi32>
    %47 = vector.shape_cast %32 : vector<16x1xf32> to vector<16x1xf32>
    %48 = vector.broadcast %47 : vector<16x1xf32> to vector<16x46xf32>
    %49 = arith.select %46, %48, %44 : vector<16x46xi1>, vector<16x46xf32>
    %c45_i32 = arith.constant 45 : i32
    %50 = vector.broadcast %c45_i32 : i32 to vector<16x46xi32>
    %51 = arith.cmpi eq, %0, %50 : vector<16x46xi32>
    %cst_6 = arith.constant 1.000000e+00 : f32
    %52 = vector.broadcast %cst_6 : f32 to vector<16x46xf32>
    %53 = arith.select %51, %52, %49 : vector<16x46xi1>, vector<16x46xf32>
    %c0_7 = arith.constant 0 : index
    %c0_8 = arith.constant 0 : index
    %54 = vector.load %arg2[%c0_7, %c0_8] : memref<46x114xf32, #tpu.memory_space<vmem>>, vector<46x114xf32>
    %cst_9 = arith.constant dense<0.000000e+00> : vector<16x114xf32>
    %55 = tpu.matmul %53, %54, %cst_9 {dimension_numbers = #tpu.dot_dimension_numbers<[1], [0], [0], [1], [0, 0, 1, 1], [], []>} : vector<16x46xf32>, vector<46x114xf32>, vector<16x114xf32> -> vector<16x114xf32>
    %cst_10 = arith.constant 0.000000e+00 : f32
    %56 = vector.broadcast %cst_10 : f32 to vector<16x114xf32>
    %57 = arith.maximumf %55, %56 : vector<16x114xf32>
    %c0_11 = arith.constant 0 : index
    %c0_12 = arith.constant 0 : index
    %58 = vector.load %arg1[%c0_11, %c0_12] : memref<16x130xf32, #tpu.memory_space<vmem>>, vector<16x114xf32>
    %59 = arith.addf %58, %57 : vector<16x114xf32>
    %c0_13 = arith.constant 0 : index
    %c0_14 = arith.constant 0 : index
    %60 = vector.load %arg3[%c0_13, %c0_14] : memref<114x64xf32, #tpu.memory_space<vmem>>, vector<114x64xf32>
    %cst_15 = arith.constant dense<0.000000e+00> : vector<16x64xf32>
    %61 = tpu.matmul %59, %60, %cst_15 {dimension_numbers = #tpu.dot_dimension_numbers<[1], [0], [0], [1], [0, 0, 1, 1], [], []>} : vector<16x114xf32>, vector<114x64xf32>, vector<16x64xf32> -> vector<16x64xf32>
    %c0_16 = arith.constant 0 : index
    %c0_17 = arith.constant 0 : index
    %62 = vector.load %arg4[%c0_16, %c0_17] : memref<1x64xf32, #tpu.memory_space<vmem>>, vector<1x64xf32>
    %63 = vector.broadcast %62 : vector<1x64xf32> to vector<16x64xf32>
    %64 = arith.addf %61, %63 : vector<16x64xf32>
    %cst_18 = arith.constant 0.000000e+00 : f32
    %65 = vector.broadcast %cst_18 : f32 to vector<16x64xf32>
    %66 = arith.maximumf %64, %65 : vector<16x64xf32>
    %c0_19 = arith.constant 0 : index
    %c0_20 = arith.constant 0 : index
    %67 = vector.load %arg5[%c0_19, %c0_20] : memref<64x10xf32, #tpu.memory_space<vmem>>, vector<64x10xf32>
    %cst_21 = arith.constant dense<0.000000e+00> : vector<16x10xf32>
    %68 = tpu.matmul %66, %67, %cst_21 {dimension_numbers = #tpu.dot_dimension_numbers<[1], [0], [0], [1], [0, 0, 1, 1], [], []>} : vector<16x64xf32>, vector<64x10xf32>, vector<16x10xf32> -> vector<16x10xf32>
    %c0_22 = arith.constant 0 : index
    %c0_23 = arith.constant 0 : index
    %69 = vector.load %arg6[%c0_22, %c0_23] : memref<1x10xf32, #tpu.memory_space<vmem>>, vector<1x10xf32>
    %70 = vector.broadcast %69 : vector<1x10xf32> to vector<16x10xf32>
    %71 = arith.addf %68, %70 : vector<16x10xf32>
    %c0_24 = arith.constant 0 : index
    %c120 = arith.constant 120 : index
    %72 = vector.load %arg1[%c0_24, %c120] : memref<16x130xf32, #tpu.memory_space<vmem>>, vector<16x10xf32>
    %73 = math.log %72 : vector<16x10xf32>
    %cst_25 = arith.constant 0.000000e+00 : f32
    %74 = vector.broadcast %cst_25 : f32 to vector<16x10xf32>
    %75 = arith.subf %74, %73 : vector<16x10xf32>
    %76 = math.log %75 : vector<16x10xf32>
    %77 = arith.subf %71, %76 : vector<16x10xf32>
    %78 = vector.extract_strided_slice %77 {offsets = [0, 0], sizes = [16, 5], strides = [1, 1]} : vector<16x10xf32> to vector<16x5xf32>
    %cst_26 = arith.constant dense<0xFF800000> : vector<16xf32>
    %79 = vector.multi_reduction <maximumf>, %78, %cst_26 [1] : vector<16x5xf32> to vector<16xf32>
    %80 = vector.shape_cast %79 : vector<16xf32> to vector<16x1xf32>
    %81 = vector.broadcast %80 : vector<16x1xf32> to vector<16x5xf32>
    %82 = arith.subf %78, %81 : vector<16x5xf32>
    %83 = math.exp %82 : vector<16x5xf32>
    %cst_27 = arith.constant dense<0.000000e+00> : vector<16xf32>
    %84 = vector.multi_reduction <add>, %83, %cst_27 [1] : vector<16x5xf32> to vector<16xf32>
    %85 = vector.shape_cast %84 : vector<16xf32> to vector<16x1xf32>
    %86 = tpu.reciprocal %85 : vector<16x1xf32> -> vector<16x1xf32>
    %87 = vector.broadcast %86 : vector<16x1xf32> to vector<16x5xf32>
    %88 = arith.mulf %83, %87 : vector<16x5xf32>
    %89 = vector.extract_strided_slice %77 {offsets = [0, 5], sizes = [16, 5], strides = [1, 1]} : vector<16x10xf32> to vector<16x5xf32>
    %cst_28 = arith.constant dense<0xFF800000> : vector<16xf32>
    %90 = vector.multi_reduction <maximumf>, %89, %cst_28 [1] : vector<16x5xf32> to vector<16xf32>
    %91 = vector.shape_cast %90 : vector<16xf32> to vector<16x1xf32>
    %92 = vector.broadcast %91 : vector<16x1xf32> to vector<16x5xf32>
    %93 = arith.subf %89, %92 : vector<16x5xf32>
    %94 = math.exp %93 : vector<16x5xf32>
    %cst_29 = arith.constant dense<0.000000e+00> : vector<16xf32>
    %95 = vector.multi_reduction <add>, %94, %cst_29 [1] : vector<16x5xf32> to vector<16xf32>
    %96 = vector.shape_cast %95 : vector<16xf32> to vector<16x1xf32>
    %97 = tpu.reciprocal %96 : vector<16x1xf32> -> vector<16x1xf32>
    %98 = vector.broadcast %97 : vector<16x1xf32> to vector<16x5xf32>
    %99 = arith.mulf %94, %98 : vector<16x5xf32>
    %100 = tpu.concatenate %88, %99 in 1 : vector<16x5xf32>, vector<16x5xf32> -> vector<16x10xf32>
    %c0_30 = arith.constant 0 : index
    %c0_31 = arith.constant 0 : index
    %101 = vector.load %arg7[%c0_30, %c0_31] : memref<16x10xf32, #tpu.memory_space<vmem>>, vector<16x10xf32>
    tpu.vector_store %arg7[%c0_30, %c0_31], %100 {strides = array<i32>} : memref<16x10xf32, #tpu.memory_space<vmem>>, vector<16x10xf32>,
    return
  }
  func.func @transform_0(%arg0: i32) -> (i32, i32) {
    %c0_i32 = arith.constant 0 : i32
    %c0_i32_0 = arith.constant 0 : i32
    return %arg0, %c0_i32 : i32, i32
  }
  func.func @transform_1(%arg0: i32) -> (i32, i32) {
    %c0_i32 = arith.constant 0 : i32
    %c0_i32_0 = arith.constant 0 : i32
    %c0_i32_1 = arith.constant 0 : i32
    return %c0_i32, %c0_i32_0 : i32, i32
  }
  func.func @transform_2(%arg0: i32) -> (i32, i32) {
    %c0_i32 = arith.constant 0 : i32
    %c0_i32_0 = arith.constant 0 : i32
    %c0_i32_1 = arith.constant 0 : i32
    return %c0_i32, %c0_i32_0 : i32, i32
  }
  func.func @transform_3(%arg0: i32) -> (i32, i32) {
    %c0_i32 = arith.constant 0 : i32
    %c0_i32_0 = arith.constant 0 : i32
    %c0_i32_1 = arith.constant 0 : i32
    return %c0_i32, %c0_i32_0 : i32, i32
  }
  func.func @transform_4(%arg0: i32) -> (i32, i32) {
    %c0_i32 = arith.constant 0 : i32
    %c0_i32_0 = arith.constant 0 : i32
    %c0_i32_1 = arith.constant 0 : i32
    return %c0_i32, %c0_i32_0 : i32, i32
  }
  func.func @transform_5(%arg0: i32) -> (i32, i32) {
    %c0_i32 = arith.constant 0 : i32
    %c0_i32_0 = arith.constant 0 : i32
    %c0_i32_1 = arith.constant 0 : i32
    return %c0_i32, %c0_i32_0 : i32, i32
  }
  func.func @transform_6(%arg0: i32) -> (i32, i32) {
    %c0_i32 = arith.constant 0 : i32
    %c0_i32_0 = arith.constant 0 : i32
    return %arg0, %c0_i32 : i32, i32
  }
}

</mosaic_0001>

<llo_original>
// kernel: tpu_custom_call.1
$region0: #{tpu_custom_call.1}
  #allocation0 [shape = 'u32[]', space=smem, size = 0x4, offset = 0x4, fixed_abs, tag = 'smem constant byte address 0x4 - core index']
  #allocation1 [shape = 'u32[144,128]{1,0:T(1,128)}', space=vmem, size = 0x12000, scoped, tag = 'internal scratch']
  %s0 = inlined_call_operand.vmem [shape: f32[16,130], index: 0, kind: input, shape index: {}]
  %s1 = inlined_call_operand.vmem [shape: f32[46,114], index: 1, kind: input, shape index: {}]
  %s2 = inlined_call_operand.vmem [shape: f32[114,64], index: 2, kind: input, shape index: {}]
  %s3 = inlined_call_operand.vmem [shape: f32[1,64], index: 3, kind: input, shape index: {}]
  %s4 = inlined_call_operand.vmem [shape: f32[64,10], index: 4, kind: input, shape index: {}]
  %s5 = inlined_call_operand.vmem [shape: f32[1,10], index: 5, kind: input, shape index: {}]
  %s6 = inlined_call_operand.hbm [shape: f32[16,10], index: 6, kind: output, shape index: {}]
  %s7 = sld [smem:[#allocation0]]
  $region34: #{tpu_custom_call.1} parent=0
    _
  %s9 = ssub.s32 1, %s7
  %s10 = scalar_select 0, %s9, %s7
  $region1: #{tpu_custom_call.1} parent=0
    #allocation2 [shape = 'u8[8192]{0}', space=vmem, size = 0x2000, scoped, tag = 'output window, operand 0, single buffered']
    #allocation3 [shape = 's32[1]{0}', space=sflag, size = 0x4, scoped, tag = 'scoped memory for tpu_custom_call.1']
    %11 = vsyncpa [#allocation3], 0
    // Predicated region
    $region2: #{tpu_custom_call.1} parent=1 // pred_check
      _
    $region3: #{tpu_custom_call.1} parent=1 // pred_check_branch
      %13 = sbr.rel (0) target = $region5
    $region4: #{tpu_custom_call.1} parent=1 // pred_region
      _
    $region5: #{tpu_custom_call.1} parent=1 // pred_fallthru
      _
    // Predicated region
    $region6: #{tpu_custom_call.1} parent=1 // pred_check
      _
    $region7: #{tpu_custom_call.1} parent=1 // pred_check_branch
      %15 = sbr.rel (0) target = $region9
    $region8: #{tpu_custom_call.1} parent=1 // pred_region
      _
    $region9: #{tpu_custom_call.1} parent=1 // pred_fallthru
      _
    // Predicated region
    $region10: #{tpu_custom_call.1} parent=1 // pred_check
      _
    $region11: #{tpu_custom_call.1} parent=1 // pred_check_branch
      %17 = sbr.rel (0) target = $region13
    $region12: #{tpu_custom_call.1} parent=1 // pred_region
      _
    $region13: #{tpu_custom_call.1} parent=1 // pred_fallthru
      _
    // Predicated region
    $region14: #{tpu_custom_call.1} parent=1 // pred_check
      _
    $region15: #{tpu_custom_call.1} parent=1 // pred_check_branch
      %19 = sbr.rel (0) target = $region17
    $region16: #{tpu_custom_call.1} parent=1 // pred_region
      _
    $region17: #{tpu_custom_call.1} parent=1 // pred_fallthru
      _
    // Predicated region
    $region18: #{tpu_custom_call.1} parent=1 // pred_check
      _
    $region19: #{tpu_custom_call.1} parent=1 // pred_check_branch
      %21 = sbr.rel (0) target = $region21
    $region20: #{tpu_custom_call.1} parent=1 // pred_region
      _
    $region21: #{tpu_custom_call.1} parent=1 // pred_fallthru
      _
    // Predicated region
    $region22: #{tpu_custom_call.1} parent=1 // pred_check
      _
    $region23: #{tpu_custom_call.1} parent=1 // pred_check_branch
      %23 = sbr.rel (0) target = $region25
    $region24: #{tpu_custom_call.1} parent=1 // pred_region
      _
    $region25: #{tpu_custom_call.1} parent=1 // pred_fallthru
      _
    %v24 = vlaneseq
    %v25 = vand.u32 %v24, 127
    %v26 = vld [vmem:[%s0] sm:$0xff]
    %v27 = vld [vmem:[%s0 + $0x10] sm:$0xff]
    %v28 = vcvt.f32.s32.to.zero.pseudo %v26
    %v29 = vcvt.f32.s32.to.zero.pseudo %v27
    %30 = vset.pattern.permute.xlu0 114
    %31 = vperm.xlu0 %30, %v28
    %v32 = vpop.permute.xlu0 %31
    %33 = vset.pattern.permute.xlu0 114
    %34 = vperm.xlu0 %33, %v29
    %v35 = vpop.permute.xlu0 %34
    %vm36 = vcmp.eq.s32.totalorder %v25, %v32
    %vm37 = vcmp.eq.s32.totalorder %v25, %v35
    %v38 = vadd.s32 %v28, 16
    %v39 = vadd.s32 %v29, 16
    %40 = vset.pattern.permute.xlu0 116
    %41 = vperm.xlu0 %40, %v38
    %v42 = vpop.permute.xlu0 %41
    %43 = vset.pattern.permute.xlu0 116
    %44 = vperm.xlu0 %43, %v39
    %v45 = vpop.permute.xlu0 %44
    %vm46 = vcmp.eq.s32.totalorder %v25, %v42
    %vm47 = vcmp.eq.s32.totalorder %v25, %v45
    %vm48 = vmor %vm36, %vm46
    %vm49 = vmor %vm37, %vm47
    %v50 = vsel %vm48, 1, 0
    %v51 = vsel %vm49, 1, 0
    %v52 = vcvt.s32.f32 %v50
    %v53 = vcvt.s32.f32 %v51
    %v54 = vadd.f32 %v52, 0.0
    %v55 = vadd.f32 %v53, 0.0
    %vm56 = vcmp.eq.s32.totalorder %v25, 21
    %58 = vset.pattern.permute.xlu0 118
    %59 = vperm.xlu0 %58, %v26
    %v60 = vpop.permute.xlu0 %59
    %63 = vset.pattern.permute.xlu0 118
    %64 = vperm.xlu0 %63, %v27
    %v65 = vpop.permute.xlu0 %64
    %v67 = vsel %vm56, %v60, %v54
    %v68 = vsel %vm56, %v65, %v55
    %vm69 = vcmp.eq.s32.totalorder %v25, 22
    %v70 = vsel %vm69, 1.0, %v67
    %v71 = vsel %vm69, 1.0, %v68
    %v72 = vadd.s32 %v28, 23
    %v73 = vadd.s32 %v29, 23
    %74 = vset.pattern.permute.xlu0 115
    %75 = vperm.xlu0 %74, %v72
    %v76 = vpop.permute.xlu0 %75
    %77 = vset.pattern.permute.xlu0 115
    %78 = vperm.xlu0 %77, %v73
    %v79 = vpop.permute.xlu0 %78
    %vm80 = vcmp.eq.s32.totalorder %v25, %v76
    %vm81 = vcmp.eq.s32.totalorder %v25, %v79
    %v82 = vadd.s32 %v28, 39
    %v83 = vadd.s32 %v29, 39
    %84 = vset.pattern.permute.xlu0 117
    %85 = vperm.xlu0 %84, %v82
    %v86 = vpop.permute.xlu0 %85
    %87 = vset.pattern.permute.xlu0 117
    %88 = vperm.xlu0 %87, %v83
    %v89 = vpop.permute.xlu0 %88
    %vm90 = vcmp.eq.s32.totalorder %v25, %v86
    %vm91 = vcmp.eq.s32.totalorder %v25, %v89
    %vm92 = vmor %vm80, %vm90
    %vm93 = vmor %vm81, %vm91
    %v94 = vsel %vm92, 1, 0
    %v95 = vsel %vm93, 1, 0
    %v96 = vcvt.s32.f32 %v94
    %v97 = vcvt.s32.f32 %v95
    %v98 = vadd.f32 %v70, %v96
    %v99 = vadd.f32 %v71, %v97
    %vm100 = vcmp.eq.s32.totalorder %v25, 44
    %101 = vset.pattern.permute.xlu0 119
    %102 = vperm.xlu0 %101, %v26
    %v103 = vpop.permute.xlu0 %102
    %105 = vset.pattern.permute.xlu0 119
    %106 = vperm.xlu0 %105, %v27
    %v107 = vpop.permute.xlu0 %106
    %v109 = vsel %vm100, %v103, %v98
    %v110 = vsel %vm100, %v107, %v99
    %vm111 = vcmp.eq.s32.totalorder %v25, 45
    %v112 = vsel %vm111, 1.0, %v109
    %v113 = vsel %vm111, 1.0, %v110
    %v114 = vld [vmem:[%s1] sm:$0xff]
    %v115 = vld [vmem:[%s1 + $0x8] sm:$0xff]
    %v116 = vld [vmem:[%s1 + $0x10] sm:$0xff]
    %v117 = vld [vmem:[%s1 + $0x18] sm:$0xff]
    %v118 = vld [vmem:[%s1 + $0x20] sm:$0xff]
    %v119 = vld [vmem:[%s1 + $0x28] sm:$0x3f]
    %vm120 = vcmask 375808
    %v122 = vsel %vm120, %v112, 0
    %v125 = vsel %vm120, %v113, 0
    %vm127 = vcmask 1045504
    %v129 = vsel %vm127, %v119, 0
    %131 = vmatprep.subr.mxu0 0.0
    %132 = vmatpush1.msra.mxu0 %v114
    %133 = vmatprep.subr.mxu0 0.0
    %134 = vmatpush1.msra.mxu0 %v115
    %135 = vmatprep.subr.mxu0 0.0
    %136 = vmatpush1.msra.mxu0 %v116
    %137 = vmatprep.subr.mxu0 0.0
    %138 = vmatpush1.msra.mxu0 %v117
    %139 = vmatprep.subr.mxu0 0.0
    %140 = vmatpush1.msra.mxu0 %v118
    %141 = vmatprep.subr.mxu0 0.0
    %142 = vmatpush1.msra.mxu0 %v129
    %143 = vmatprep.subr.mxu0 0.0
    %144 = vmatpush1.msra.mxu0 0.0
    %145 = vmatprep.subr.mxu0 0.0
    %146 = vmatpush1.msra.mxu0 0.0
    %147 = vmatprep.subr.mxu0 0.0
    %148 = vmatpush1.msra.mxu0 0.0
    %149 = vmatprep.subr.mxu0 0.0
    %150 = vmatpush1.msra.mxu0 0.0
    %151 = vmatprep.subr.mxu0 0.0
    %152 = vmatpush1.msra.mxu0 0.0
    %153 = vmatprep.subr.mxu0 0.0
    %154 = vmatpush1.msra.mxu0 0.0
    %155 = vmatprep.subr.mxu0 0.0
    %156 = vmatpush1.msra.mxu0 0.0
    %157 = vmatprep.subr.mxu0 0.0
    %158 = vmatpush1.msra.mxu0 0.0
    %159 = vmatprep.subr.mxu0 0.0
    %160 = vmatpush1.msra.mxu0 0.0
    %161 = vmatprep.subr.mxu0 0.0
    %162 = vmatpush1.msra.mxu0 0.0
    %163 = vmatprep.subr.mxu0 0.0
    %164 = vmatpush1.msra.mxu0 0.0
    %165 = vmatprep.subr.mxu0 0.0
    %166 = vmatpush1.msra.mxu0 0.0
    %167 = vmatprep.subr.mxu0 0.0
    %168 = vmatpush1.msra.mxu0 0.0
    %169 = vmatprep.subr.mxu0 0.0
    %170 = vmatpush1.msra.mxu0 0.0
    %171 = vmatprep.subr.mxu0 0.0
    %172 = vmatpush1.msra.mxu0 0.0
    %173 = vmatprep.subr.mxu0 0.0
    %174 = vmatpush1.msra.mxu0 0.0
    %175 = vmatprep.subr.mxu0 0.0
    %176 = vmatpush1.msra.mxu0 0.0
    %177 = vmatprep.subr.mxu0 0.0
    %178 = vmatpush1.msra.mxu0 0.0
    %179 = vmatprep.subr.mxu0 0.0
    %180 = vmatpush1.msra.mxu0 0.0
    %181 = vmatprep.subr.mxu0 0.0
    %182 = vmatpush1.msra.mxu0 0.0
    %183 = vmatprep.subr.mxu0 0.0
    %184 = vmatpush1.msra.mxu0 0.0
    %185 = vmatprep.subr.mxu0 0.0
    %186 = vmatpush1.msra.mxu0 0.0
    %187 = vmatprep.subr.mxu0 0.0
    %188 = vmatpush1.msra.mxu0 0.0
    %189 = vmatprep.subr.mxu0 0.0
    %190 = vmatpush1.msra.mxu0 0.0
    %191 = vmatprep.subr.mxu0 0.0
    %192 = vmatpush1.msra.mxu0 0.0
    %193 = vmatprep.subr.mxu0 0.0
    %194 = vmatpush1.msra.mxu0 0.0
    %195 = vmatprep.mubr.f32.mxu0 0.0
    %196 = vmatmul.mubr.f32.gmra.mrb[0].mxu0 %v122
    %v197 = vpop.f32.mrb[0].mxu0
    %v198 = vadd.f32 0.0, %v197
    %v199 = vpop.f32.mrb[0].mxu0
    %200 = vmatprep.mubr.f32.mxu0 0.0
    %201 = vmatmul.mubr.f32.gmra.mrb[0].mxu0 %v125
    %v202 = vpop.f32.mrb[0].mxu0
    %v203 = vadd.f32 0.0, %v202
    %v204 = vpop.f32.mrb[0].mxu0
    %205 = vdwg.mxu0
    %v206 = vmax.f32 %v198, 0.0
    %v207 = vmax.f32 %v203, 0.0
    %v208 = vadd.f32 %v26, %v206
    %v209 = vadd.f32 %v27, %v207
    %v210 = vld [vmem:[%s2] sm:$0xff]
    %v211 = vld [vmem:[%s2 + $0x8] sm:$0xff]
    %v212 = vld [vmem:[%s2 + $0x10] sm:$0xff]
    %v213 = vld [vmem:[%s2 + $0x18] sm:$0xff]
    %v214 = vld [vmem:[%s2 + $0x20] sm:$0xff]
    %v215 = vld [vmem:[%s2 + $0x28] sm:$0xff]
    %v216 = vld [vmem:[%s2 + $0x30] sm:$0xff]
    %v217 = vld [vmem:[%s2 + $0x38] sm:$0xff]
    %v218 = vld [vmem:[%s2 + $0x40] sm:$0xff]
    %v219 = vld [vmem:[%s2 + $0x48] sm:$0xff]
    %v220 = vld [vmem:[%s2 + $0x50] sm:$0xff]
    %v221 = vld [vmem:[%s2 + $0x58] sm:$0xff]
    %v222 = vld [vmem:[%s2 + $0x60] sm:$0xff]
    %v223 = vld [vmem:[%s2 + $0x68] sm:$0xff]
    %v224 = vld [vmem:[%s2 + $0x70] sm:$0x3]
    %v225 = vld [vmem:[%s3] sm:$0x1]
    %v227 = vlaneseq
    %v228 = vshrl.u32 %v227, 7
    %v229 = vsub.s32 0, %v228
    %v230 = vrot.slane %v225, %v229
    %vm232 = vcmask 932864
    %v234 = vsel %vm232, %v208, 0
    %v237 = vsel %vm232, %v209, 0
    %vm239 = vcmask 1041408
    %v241 = vsel %vm239, %v224, 0
    %243 = vmatprep.subr.mxu0 0.0
    %244 = vmatpush1.msra.mxu0 %v210
    %245 = vmatprep.subr.mxu0 0.0
    %246 = vmatpush1.msra.mxu0 %v211
    %247 = vmatprep.subr.mxu0 0.0
    %248 = vmatpush1.msra.mxu0 %v212
    %249 = vmatprep.subr.mxu0 0.0
    %250 = vmatpush1.msra.mxu0 %v213
    %251 = vmatprep.subr.mxu0 0.0
    %252 = vmatpush1.msra.mxu0 %v214
    %253 = vmatprep.subr.mxu0 0.0
    %254 = vmatpush1.msra.mxu0 %v215
    %255 = vmatprep.subr.mxu0 0.0
    %256 = vmatpush1.msra.mxu0 %v216
    %257 = vmatprep.subr.mxu0 0.0
    %258 = vmatpush1.msra.mxu0 %v217
    %259 = vmatprep.subr.mxu0 0.0
    %260 = vmatpush1.msra.mxu0 %v218
    %261 = vmatprep.subr.mxu0 0.0
    %262 = vmatpush1.msra.mxu0 %v219
    %263 = vmatprep.subr.mxu0 0.0
    %264 = vmatpush1.msra.mxu0 %v220
    %265 = vmatprep.subr.mxu0 0.0
    %266 = vmatpush1.msra.mxu0 %v221
    %267 = vmatprep.subr.mxu0 0.0
    %268 = vmatpush1.msra.mxu0 %v222
    %269 = vmatprep.subr.mxu0 0.0
    %270 = vmatpush1.msra.mxu0 %v223
    %271 = vmatprep.subr.mxu0 0.0
    %272 = vmatpush1.msra.mxu0 %v241
    %273 = vmatprep.subr.mxu0 0.0
    %274 = vmatpush1.msra.mxu0 0.0
    %275 = vmatprep.subr.mxu0 0.0
    %276 = vmatpush1.msra.mxu0 0.0
    %277 = vmatprep.subr.mxu0 0.0
    %278 = vmatpush1.msra.mxu0 0.0
    %279 = vmatprep.subr.mxu0 0.0
    %280 = vmatpush1.msra.mxu0 0.0
    %281 = vmatprep.subr.mxu0 0.0
    %282 = vmatpush1.msra.mxu0 0.0
    %283 = vmatprep.subr.mxu0 0.0
    %284 = vmatpush1.msra.mxu0 0.0
    %285 = vmatprep.subr.mxu0 0.0
    %286 = vmatpush1.msra.mxu0 0.0
    %287 = vmatprep.subr.mxu0 0.0
    %288 = vmatpush1.msra.mxu0 0.0
    %289 = vmatprep.subr.mxu0 0.0
    %290 = vmatpush1.msra.mxu0 0.0
    %291 = vmatprep.subr.mxu0 0.0
    %292 = vmatpush1.msra.mxu0 0.0
    %293 = vmatprep.subr.mxu0 0.0
    %294 = vmatpush1.msra.mxu0 0.0
    %295 = vmatprep.subr.mxu0 0.0
    %296 = vmatpush1.msra.mxu0 0.0
    %297 = vmatprep.subr.mxu0 0.0
    %298 = vmatpush1.msra.mxu0 0.0
    %299 = vmatprep.subr.mxu0 0.0
    %300 = vmatpush1.msra.mxu0 0.0
    %301 = vmatprep.subr.mxu0 0.0
    %302 = vmatpush1.msra.mxu0 0.0
    %303 = vmatprep.subr.mxu0 0.0
    %304 = vmatpush1.msra.mxu0 0.0
    %305 = vmatprep.subr.mxu0 0.0
    %306 = vmatpush1.msra.mxu0 0.0
    %307 = vmatprep.mubr.f32.mxu0 0.0
    %308 = vmatmul.mubr.f32.gmra.mrb[0].mxu0 %v234
    %v309 = vpop.f32.mrb[0].mxu0
    %v310 = vadd.f32 %v230, %v309
    %v311 = vpop.f32.mrb[0].mxu0
    %312 = vmatprep.mubr.f32.mxu0 0.0
    %313 = vmatmul.mubr.f32.gmra.mrb[0].mxu0 %v237
    %v314 = vpop.f32.mrb[0].mxu0
    %v315 = vadd.f32 %v230, %v314
    %v316 = vpop.f32.mrb[0].mxu0
    %317 = vdwg.mxu0
    %v318 = vmax.f32 %v310, 0.0
    %v319 = vmax.f32 %v315, 0.0
    %v320 = vld [vmem:[%s4] sm:$0xff]
    %v321 = vld [vmem:[%s4 + $0x8] sm:$0xff]
    %v322 = vld [vmem:[%s4 + $0x10] sm:$0xff]
    %v323 = vld [vmem:[%s4 + $0x18] sm:$0xff]
    %v324 = vld [vmem:[%s4 + $0x20] sm:$0xff]
    %v325 = vld [vmem:[%s4 + $0x28] sm:$0xff]
    %v326 = vld [vmem:[%s4 + $0x30] sm:$0xff]
    %v327 = vld [vmem:[%s4 + $0x38] sm:$0xff]
    %v328 = vld [vmem:[%s5] sm:$0x1]
    %v330 = vlaneseq
    %v331 = vshrl.u32 %v330, 7
    %v332 = vsub.s32 0, %v331
    %v333 = vrot.slane %v328, %v332
    %vm335 = vcmask 523264
    %v337 = vsel %vm335, %v318, 0
    %v340 = vsel %vm335, %v319, 0
    %342 = vmatprep.subr.mxu0 0.0
    %343 = vmatpush1.msra.mxu0 %v320
    %344 = vmatprep.subr.mxu0 0.0
    %345 = vmatpush1.msra.mxu0 %v321
    %346 = vmatprep.subr.mxu0 0.0
    %347 = vmatpush1.msra.mxu0 %v322
    %348 = vmatprep.subr.mxu0 0.0
    %349 = vmatpush1.msra.mxu0 %v323
    %350 = vmatprep.subr.mxu0 0.0
    %351 = vmatpush1.msra.mxu0 %v324
    %352 = vmatprep.subr.mxu0 0.0
    %353 = vmatpush1.msra.mxu0 %v325
    %354 = vmatprep.subr.mxu0 0.0
    %355 = vmatpush1.msra.mxu0 %v326
    %356 = vmatprep.subr.mxu0 0.0
    %357 = vmatpush1.msra.mxu0 %v327
    %358 = vmatprep.subr.mxu0 0.0
    %359 = vmatpush1.msra.mxu0 0.0
    %360 = vmatprep.subr.mxu0 0.0
    %361 = vmatpush1.msra.mxu0 0.0
    %362 = vmatprep.subr.mxu0 0.0
    %363 = vmatpush1.msra.mxu0 0.0
    %364 = vmatprep.subr.mxu0 0.0
    %365 = vmatpush1.msra.mxu0 0.0
    %366 = vmatprep.subr.mxu0 0.0
    %367 = vmatpush1.msra.mxu0 0.0
    %368 = vmatprep.subr.mxu0 0.0
    %369 = vmatpush1.msra.mxu0 0.0
    %370 = vmatprep.subr.mxu0 0.0
    %371 = vmatpush1.msra.mxu0 0.0
    %372 = vmatprep.subr.mxu0 0.0
    %373 = vmatpush1.msra.mxu0 0.0
    %374 = vmatprep.subr.mxu0 0.0
    %375 = vmatpush1.msra.mxu0 0.0
    %376 = vmatprep.subr.mxu0 0.0
    %377 = vmatpush1.msra.mxu0 0.0
    %378 = vmatprep.subr.mxu0 0.0
    %379 = vmatpush1.msra.mxu0 0.0
    %380 = vmatprep.subr.mxu0 0.0
    %381 = vmatpush1.msra.mxu0 0.0
    %382 = vmatprep.subr.mxu0 0.0
    %383 = vmatpush1.msra.mxu0 0.0
    %384 = vmatprep.subr.mxu0 0.0
    %385 = vmatpush1.msra.mxu0 0.0
    %386 = vmatprep.subr.mxu0 0.0
    %387 = vmatpush1.msra.mxu0 0.0
    %388 = vmatprep.subr.mxu0 0.0
    %389 = vmatpush1.msra.mxu0 0.0
    %390 = vmatprep.subr.mxu0 0.0
    %391 = vmatpush1.msra.mxu0 0.0
    %392 = vmatprep.subr.mxu0 0.0
    %393 = vmatpush1.msra.mxu0 0.0
    %394 = vmatprep.subr.mxu0 0.0
    %395 = vmatpush1.msra.mxu0 0.0
    %396 = vmatprep.subr.mxu0 0.0
    %397 = vmatpush1.msra.mxu0 0.0
    %398 = vmatprep.subr.mxu0 0.0
    %399 = vmatpush1.msra.mxu0 0.0
    %400 = vmatprep.subr.mxu0 0.0
    %401 = vmatpush1.msra.mxu0 0.0
    %402 = vmatprep.subr.mxu0 0.0
    %403 = vmatpush1.msra.mxu0 0.0
    %404 = vmatprep.subr.mxu0 0.0
    %405 = vmatpush1.msra.mxu0 0.0
    %406 = vmatprep.mubr.f32.mxu0 0.0
    %407 = vmatmul.mubr.f32.gmra.mrb[0].mxu0 %v337
    %v408 = vpop.f32.mrb[0].mxu0
    %v409 = vadd.f32 %v333, %v408
    %v410 = vpop.f32.mrb[0].mxu0
    %411 = vmatprep.mubr.f32.mxu0 0.0
    %412 = vmatmul.mubr.f32.gmra.mrb[0].mxu0 %v340
    %v413 = vpop.f32.mrb[0].mxu0
    %v414 = vadd.f32 %v333, %v413
    %v415 = vpop.f32.mrb[0].mxu0
    %416 = vdwg.mxu0
    %v417 = vld [vmem:[%s0] sm:$0xff]
    %v418 = vld [vmem:[%s0 + $0x8] sm:$0xff]
    %v419 = vld [vmem:[%s0 + $0x10] sm:$0xff]
    %v420 = vld [vmem:[%s0 + $0x18] sm:$0xff]
    %v421 = vlog2.pop %v417
    %v422 = vmul.f32 %v421, 0.6931472
    %v423 = vlog2.pop %v418
    %v424 = vmul.f32 %v423, 0.6931472
    %v425 = vlog2.pop %v419
    %v426 = vmul.f32 %v425, 0.6931472
    %v427 = vlog2.pop %v420
    %v428 = vmul.f32 %v427, 0.6931472
    %v429 = vsub.f32 0.0, %v422
    %v430 = vsub.f32 0.0, %v424
    %v431 = vsub.f32 0.0, %v426
    %v432 = vsub.f32 0.0, %v428
    %v433 = vlog2.pop %v429
    %v434 = vmul.f32 %v433, 0.6931472
    %v435 = vlog2.pop %v430
    %v436 = vmul.f32 %v435, 0.6931472
    %v437 = vlog2.pop %v431
    %v438 = vmul.f32 %v437, 0.6931472
    %v439 = vlog2.pop %v432
    %v440 = vmul.f32 %v439, 0.6931472
    %445 = vrot.lane.b32.xlu0 %v434, 8
    %v446 = vpop.permute.xlu0 %445
    %447 = vrot.lane.b32.xlu0 %v436, 8
    %v448 = vpop.permute.xlu0 %447
    %449 = vrot.lane.b32.xlu0 %v438, 8
    %v450 = vpop.permute.xlu0 %449
    %451 = vrot.lane.b32.xlu0 %v440, 8
    %v452 = vpop.permute.xlu0 %451
    %vm453 = vcmask 64512
    %v454 = vsel %vm453, %v446, %v448
    %v455 = vsel %vm453, %v450, %v452
    %v458 = vsub.f32 %v409, %v454
    %v459 = vsub.f32 %v414, %v455
    %vm460 = vcmask 39936
    %v461 = vsel %vm460, %v458, -inf
    %462 = vmax.xlane.f32.xlu0 %v461
    %v463 = vpop.xlane.xlu0 %462
    %v464 = vsel %vm460, %v459, -inf
    %465 = vmax.xlane.f32.xlu0 %v464
    %v466 = vpop.xlane.xlu0 %465
    %v467 = vsub.f32 %v458, %v463
    %v468 = vsub.f32 %v459, %v466
    %v469 = vmul.f32 %v467, 1.442695
    %v470 = vpow.pop %v469
    %v471 = vmul.f32 %v468, 1.442695
    %v472 = vpow.pop %v471
    %v473 = vsel %vm460, %v470, 0.0
    %474 = vadd.xlane.f32.xlu0 %v473
    %v475 = vpop.xlane.xlu0 %474
    %v476 = vsel %vm460, %v472, 0.0
    %477 = vadd.xlane.f32.xlu0 %v476
    %v478 = vpop.xlane.xlu0 %477
    %v479 = vrcp.pop %v475
    %v480 = vrcp.pop %v478
    %v481 = vmul.f32 %v470, %v479
    %v482 = vmul.f32 %v472, %v480
    %vm483 = vcmask 80936
    %v484 = vsel %vm483, %v458, -inf
    %485 = vmax.xlane.f32.xlu0 %v484
    %v486 = vpop.xlane.xlu0 %485
    %v487 = vsel %vm483, %v459, -inf
    %488 = vmax.xlane.f32.xlu0 %v487
    %v489 = vpop.xlane.xlu0 %488
    %v490 = vsub.f32 %v458, %v486
    %v491 = vsub.f32 %v459, %v489
    %v492 = vmul.f32 %v490, 1.442695
    %v493 = vpow.pop %v492
    %v494 = vmul.f32 %v491, 1.442695
    %v495 = vpow.pop %v494
    %498 = vrot.lane.b32.xlu0 %v493, 123
    %v499 = vpop.permute.xlu0 %498
    %500 = vrot.lane.b32.xlu0 %v495, 123
    %v501 = vpop.permute.xlu0 %500
    %v504 = vsel %vm460, %v499, 0.0
    %505 = vadd.xlane.f32.xlu0 %v504
    %v506 = vpop.xlane.xlu0 %505
    %v507 = vsel %vm460, %v501, 0.0
    %508 = vadd.xlane.f32.xlu0 %v507
    %v509 = vpop.xlane.xlu0 %508
    %v510 = vrcp.pop %v506
    %v511 = vrcp.pop %v509
    %v512 = vmul.f32 %v493, %v510
    %v513 = vmul.f32 %v495, %v511
    %v514 = vsel %vm460, %v481, %v512
    %v515 = vsel %vm460, %v482, %v513
    %vm516 = vcmask 80896
    %517 = vst.msk [vmem:[#allocation2] sm:$0xff] %vm516, %v514
    %518 = vst.msk [vmem:[#allocation2 + $0x8] sm:$0xff] %vm516, %v515
    // Predicated region
    $region26: #{tpu_custom_call.1} parent=1 // pred_check
      _
    $region27: #{tpu_custom_call.1} parent=1 // pred_check_branch
      %520 = sbr.rel (0) target = $region29
    $region28: #{tpu_custom_call.1} parent=1 // pred_region
      %s522 = ssub.s32 256, 256
      %523 = vsyncadd [#allocation3], %s522
      %s524 = sshll.u32 [#allocation2], 4
      %s525 = int_to_ptr.vmem [resolvable:$true] %s524
      %530 = dma.vmem_to_hbm [thread:$0]  %s525, 256, %s6, [#allocation3], 128, 128, 8
    $region29: #{tpu_custom_call.1} parent=1 // pred_fallthru
      _
    // Predicated region
    $region30: #{tpu_custom_call.1} parent=1 // pred_check
      _
    $region31: #{tpu_custom_call.1} parent=1 // pred_check_branch
      %532 = sbr.rel (0) target = $region33
    $region32: #{tpu_custom_call.1} parent=1 // pred_region
      %533 = dma.done [#allocation3], 256
    $region33: #{tpu_custom_call.1} parent=1 // pred_fallthru
      _
    %534 = vsyncpa [#allocation3], 1

</llo_original>
